<compile_context>
chip_gen: v7x
topology: tpu7x:2x2x1
jax: 0.10.0
libtpu: 0.0.40
codegen_flags: <defaults>
</compile_context>

<pallas_src>
import math

import jax
import jax.numpy as jnp
from jax.experimental import pallas as pl
from jax.experimental.pallas import tpu as pltpu

_LANES = 128            # vreg lane width (fast axis)
_ROW_ALIGN = 16         # sublane alignment (16 covers bf16 packing; 8 for f32)
_TILE_ROWS = 1024       # 1024 rows * 128 lanes * 4 B = 512 KiB per array-tile
_SMALL_FALLBACK_ELEMS = 64 * 1024


def _reparameterise_kernel(mean_ref, logvar_ref, eps_ref, z_ref):
    # z = eps * exp(0.5 * log_var) + mean   (exact PyTorch semantics)
    # std computed in f32 so bf16 inputs do not lose precision before the FMA.
    log_var = logvar_ref[...].astype(jnp.float32)
    std = jnp.exp(0.5 * log_var)
    z = eps_ref[...].astype(jnp.float32) * std + mean_ref[...].astype(jnp.float32)
    z_ref[...] = z.astype(z_ref.dtype)


def reparameterise_pallas(mean, log_var, eps, *, force_kernel: bool = False):
    """Pallas-backed VAE.reparameterise.  Works for any common shape."""
    assert mean.shape == log_var.shape == eps.shape
    assert mean.dtype == log_var.dtype == eps.dtype

    orig_shape = mean.shape
    out_dtype = mean.dtype
    n = int(math.prod(orig_shape))

    # Tiny problems: launch overhead dwarfs the data movement; let XLA fuse it.
    if n < _SMALL_FALLBACK_ELEMS and not force_kernel:
        std = jnp.exp(0.5 * log_var.astype(jnp.float32)).astype(out_dtype)
        return eps * std + mean

    # ---- lane-dense slab: flatten, pad, view as (rows, 128) -----------------
    rows = -(-n // _LANES)
    rows_padded = -(-rows // _ROW_ALIGN) * _ROW_ALIGN
    n_padded = rows_padded * _LANES

    def to_slab(x):
        flat = x.reshape(-1)
        if n_padded != n:
            flat = jnp.pad(flat, (0, n_padded - n))
        return flat.reshape(rows_padded, _LANES)

    mean2, logvar2, eps2 = to_slab(mean), to_slab(log_var), to_slab(eps)

    # ---- pipelined, tiled grid ----------------------------------------------
    block_rows = min(_TILE_ROWS, rows_padded)
    grid = (pl.cdiv(rows_padded, block_rows),)
    spec = pl.BlockSpec((block_rows, _LANES), lambda i: (i, 0))

    z2 = pl.pallas_call(
        _reparameterise_kernel,
        out_shape=jax.ShapeDtypeStruct((rows_padded, _LANES), out_dtype),
        grid=grid,
        in_specs=[spec, spec, spec],
        out_specs=spec,
        compiler_params=pltpu.CompilerParams(
            dimension_semantics=("parallel",)),   # shard grid across TCs (v7x)
    )(mean2, logvar2, eps2)

    return z2.reshape(-1)[:n].reshape(orig_shape)


class PallasVAE:
    """JAX mirror of the abstract PyTorch VAE base class."""

    def __init__(self, latent_size: int = 10):
        self._latent_size = latent_size

    # TODO(synk): `encode` is abstract in the PyTorch module (NotImplementedError).
    def encode(self, *x):
        raise NotImplementedError

    # TODO(synk): `decode` is abstract in the PyTorch module (NotImplementedError).
    def decode(self, *x):
        raise NotImplementedError

    @staticmethod
    def reparameterise(mean, log_var, eps, *, force_kernel: bool = False):
        return reparameterise_pallas(mean, log_var, eps, force_kernel=force_kernel)


def _reference(mean, log_var, eps):
    return eps * jnp.exp(0.5 * log_var) + mean


if __name__ == "__main__":
    key = jax.random.PRNGKey(0)
    vae = PallasVAE(latent_size=10)

    # --- small demo shape consistent with the module (latent_size=10) --------
    batch, latent = 4, 10
    k_mean, k_logvar, k_eps, k2 = jax.random.split(key, 4)
    mean = jax.random.normal(k_mean, (batch, latent), dtype=jnp.float32)
    log_var = 0.1 * jax.random.normal(k_logvar, (batch, latent), dtype=jnp.float32)
    eps = jax.random.normal(k_eps, (batch, latent), dtype=jnp.float32)

    # Force the Pallas kernel path so the kernel itself is exercised/checked.
    z_kernel = jax.block_until_ready(
        vae.reparameterise(mean, log_var, eps, force_kernel=True))
    z_ref = _reference(mean, log_var, eps)
    assert z_kernel.shape == (batch, latent)
    assert jnp.allclose(z_kernel, z_ref, atol=1e-6, rtol=1e-6), "kernel mismatch"

    # Default dispatch at tiny size uses the fused-XLA fallback.
    z_fallback = jax.block_until_ready(vae.reparameterise(mean, log_var, eps))
    assert jnp.allclose(z_fallback, z_ref, atol=1e-6, rtol=1e-6), "fallback mismatch"

    # --- medium shape: naturally takes the kernel path (padding + lane-dense) -
    kb1, kb2, kb3 = jax.random.split(k2, 3)
    mean_m = jax.random.normal(kb1, (512, 130), dtype=jnp.float32)
    logvar_m = 0.1 * jax.random.normal(kb2, (512, 130), dtype=jnp.float32)
    eps_m = jax.random.normal(kb3, (512, 130), dtype=jnp.float32)
    z_m = jax.block_until_ready(vae.reparameterise(mean_m, logvar_m, eps_m))
    assert z_m.shape == (512, 130)
    assert jnp.allclose(z_m, _reference(mean_m, logvar_m, eps_m),
                        atol=1e-6, rtol=1e-6), "medium-shape kernel mismatch"

    print("KERNEL_OK")
</pallas_src>

<mosaic_0001>
module attributes {stable_mosaic.version = 11 : i64} {
  func.func @_reparameterise_kernel(%arg0: i32, %arg1: memref<16x128xf32, #tpu.memory_space<vmem>>, %arg2: memref<16x128xf32, #tpu.memory_space<vmem>>, %arg3: memref<16x128xf32, #tpu.memory_space<vmem>>, %arg4: memref<16x128xf32, #tpu.memory_space<vmem>>) attributes {dimension_semantics = [#tpu.dimension_semantics<parallel>], iteration_bounds = array<i64: 1>, scalar_prefetch = 0 : i64, scratch_operands = 0 : i64, tpu.core_type = #tpu.core_type<tc>, window_params = [{transform_indices = @transform_0, window_bounds = array<i64: 16, 128>}, {transform_indices = @transform_1, window_bounds = array<i64: 16, 128>}, {transform_indices = @transform_2, window_bounds = array<i64: 16, 128>}, {transform_indices = @transform_3, window_bounds = array<i64: 16, 128>}]} {
    %c0 = arith.constant 0 : index
    %c0_0 = arith.constant 0 : index
    %0 = vector.load %arg2[%c0, %c0_0] : memref<16x128xf32, #tpu.memory_space<vmem>>, vector<16x128xf32>
    %cst = arith.constant 5.000000e-01 : f32
    %1 = vector.broadcast %cst : f32 to vector<16x128xf32>
    %2 = arith.mulf %1, %0 : vector<16x128xf32>
    %3 = math.exp %2 : vector<16x128xf32>
    %c0_1 = arith.constant 0 : index
    %c0_2 = arith.constant 0 : index
    %4 = vector.load %arg3[%c0_1, %c0_2] : memref<16x128xf32, #tpu.memory_space<vmem>>, vector<16x128xf32>
    %5 = arith.mulf %4, %3 : vector<16x128xf32>
    %c0_3 = arith.constant 0 : index
    %c0_4 = arith.constant 0 : index
    %6 = vector.load %arg1[%c0_3, %c0_4] : memref<16x128xf32, #tpu.memory_space<vmem>>, vector<16x128xf32>
    %7 = arith.addf %5, %6 : vector<16x128xf32>
    %c0_5 = arith.constant 0 : index
    %c0_6 = arith.constant 0 : index
    %8 = vector.load %arg4[%c0_5, %c0_6] : memref<16x128xf32, #tpu.memory_space<vmem>>, vector<16x128xf32>
    tpu.vector_store %arg4[%c0_5, %c0_6], %7 {strides = array<i32>} : memref<16x128xf32, #tpu.memory_space<vmem>>, vector<16x128xf32>,
    return
  }
  func.func @transform_0(%arg0: i32) -> (i32, i32) {
    %c0_i32 = arith.constant 0 : i32
    %c0_i32_0 = arith.constant 0 : i32
    return %arg0, %c0_i32 : i32, i32
  }
  func.func @transform_1(%arg0: i32) -> (i32, i32) {
    %c0_i32 = arith.constant 0 : i32
    %c0_i32_0 = arith.constant 0 : i32
    return %arg0, %c0_i32 : i32, i32
  }
  func.func @transform_2(%arg0: i32) -> (i32, i32) {
    %c0_i32 = arith.constant 0 : i32
    %c0_i32_0 = arith.constant 0 : i32
    return %arg0, %c0_i32 : i32, i32
  }
  func.func @transform_3(%arg0: i32) -> (i32, i32) {
    %c0_i32 = arith.constant 0 : i32
    %c0_i32_0 = arith.constant 0 : i32
    return %arg0, %c0_i32 : i32, i32
  }
}

</mosaic_0001>

<llo_original>
// kernel: tpu_custom_call.1
$region0: #{tpu_custom_call.1}
  #allocation0 [shape = 'u32[]', space=smem, size = 0x4, offset = 0x4, fixed_abs, tag = 'smem constant byte address 0x4 - core index']
  #allocation1 [shape = 'u32[144,128]{1,0:T(1,128)}', space=vmem, size = 0x12000, scoped, tag = 'internal scratch']
  %s0 = inlined_call_operand.hbm [shape: f32[16,128], index: 0, kind: input, shape index: {}]
  %s1 = inlined_call_operand.hbm [shape: f32[16,128], index: 1, kind: input, shape index: {}]
  %s2 = inlined_call_operand.hbm [shape: f32[16,128], index: 2, kind: input, shape index: {}]
  %s3 = inlined_call_operand.hbm [shape: f32[16,128], index: 3, kind: output, shape index: {}]
  %s4 = sld [smem:[#allocation0]]
  $region34: #{tpu_custom_call.1} parent=0
    _
  %s6 = ssub.s32 1, %s4
  %s7 = scalar_select 0, %s6, %s4
  $region1: #{tpu_custom_call.1} parent=0
    #allocation2 [shape = 'u8[8192]{0}', space=vmem, size = 0x2000, scoped, tag = 'input window, operand 0, single buffered']
    #allocation3 [shape = 's32[1]{0}', space=sflag, size = 0x4, scoped, tag = 'scoped memory for tpu_custom_call.1']
    #allocation4 [shape = 's32[1]{0}', space=sflag, size = 0x4, scoped, tag = 'scoped memory for tpu_custom_call.1']
    #allocation5 [shape = 'u8[8192]{0}', space=vmem, size = 0x2000, scoped, tag = 'input window, operand 1, single buffered']
    #allocation6 [shape = 's32[1]{0}', space=sflag, size = 0x4, scoped, tag = 'scoped memory for tpu_custom_call.1']
    #allocation7 [shape = 'u8[8192]{0}', space=vmem, size = 0x2000, scoped, tag = 'input window, operand 2, single buffered']
    #allocation8 [shape = 'u8[8192]{0}', space=vmem, size = 0x2000, scoped, tag = 'output window, operand 0, single buffered']
    %8 = vsyncpa [#allocation3], 0
    %9 = vsyncpa [#allocation6], 0
    %10 = vsyncpa [#allocation4], 0
    // Predicated region
    $region2: #{tpu_custom_call.1} parent=1 // pred_check
      _
    $region3: #{tpu_custom_call.1} parent=1 // pred_check_branch
      %12 = sbr.rel (0) target = $region5
    $region4: #{tpu_custom_call.1} parent=1 // pred_region
      %s14 = ssub.s32 256, 256
      %15 = vsyncadd [#allocation3], %s14
      %s16 = sshll.u32 [#allocation2], 4
      %s17 = int_to_ptr.vmem [resolvable:$true] %s16
      %22 = dma.hbm_to_vmem [thread:$0]  %s0, 256, %s17, [#allocation3], 128, 128, 8
    $region5: #{tpu_custom_call.1} parent=1 // pred_fallthru
      _
    // Predicated region
    $region6: #{tpu_custom_call.1} parent=1 // pred_check
      _
    $region7: #{tpu_custom_call.1} parent=1 // pred_check_branch
      %24 = sbr.rel (0) target = $region9
    $region8: #{tpu_custom_call.1} parent=1 // pred_region
      %s26 = ssub.s32 256, 256
      %27 = vsyncadd [#allocation6], %s26
      %s28 = sshll.u32 [#allocation5], 4
      %s29 = int_to_ptr.vmem [resolvable:$true] %s28
      %34 = dma.hbm_to_vmem [thread:$0]  %s1, 256, %s29, [#allocation6], 128, 128, 8
    $region9: #{tpu_custom_call.1} parent=1 // pred_fallthru
      _
    // Predicated region
    $region10: #{tpu_custom_call.1} parent=1 // pred_check
      _
    $region11: #{tpu_custom_call.1} parent=1 // pred_check_branch
      %36 = sbr.rel (0) target = $region13
    $region12: #{tpu_custom_call.1} parent=1 // pred_region
      %s38 = ssub.s32 256, 256
      %39 = vsyncadd [#allocation6], %s38
      %s40 = sshll.u32 [#allocation7], 4
      %s41 = int_to_ptr.vmem [resolvable:$true] %s40
      %46 = dma.hbm_to_vmem [thread:$0]  %s2, 256, %s41, [#allocation6], 128, 128, 8
    $region13: #{tpu_custom_call.1} parent=1 // pred_fallthru
      _
    // Predicated region
    $region14: #{tpu_custom_call.1} parent=1 // pred_check
      _
    $region15: #{tpu_custom_call.1} parent=1 // pred_check_branch
      %48 = sbr.rel (0) target = $region17
    $region16: #{tpu_custom_call.1} parent=1 // pred_region
      %49 = dma.done [#allocation3], 256
    $region17: #{tpu_custom_call.1} parent=1 // pred_fallthru
      _
    // Predicated region
    $region18: #{tpu_custom_call.1} parent=1 // pred_check
      _
    $region19: #{tpu_custom_call.1} parent=1 // pred_check_branch
      %51 = sbr.rel (0) target = $region21
    $region20: #{tpu_custom_call.1} parent=1 // pred_region
      %52 = dma.done [#allocation6], 256
    $region21: #{tpu_custom_call.1} parent=1 // pred_fallthru
      _
    // Predicated region
    $region22: #{tpu_custom_call.1} parent=1 // pred_check
      _
    $region23: #{tpu_custom_call.1} parent=1 // pred_check_branch
      %54 = sbr.rel (0) target = $region25
    $region24: #{tpu_custom_call.1} parent=1 // pred_region
      %55 = dma.done [#allocation6], 256
    $region25: #{tpu_custom_call.1} parent=1 // pred_fallthru
      _
    %v56 = vld [vmem:[#allocation5] sm:$0xff]
    %v57 = vld [vmem:[#allocation5 + $0x8] sm:$0xff]
    %v58 = vmul.f32 %v56, 0.5
    %v59 = vmul.f32 %v57, 0.5
    %v60 = vmul.f32 %v58, 1.442695
    %v61 = vpow.pop %v60
    %v62 = vmul.f32 %v59, 1.442695
    %v63 = vpow.pop %v62
    %v64 = vld [vmem:[#allocation7] sm:$0xff]
    %v65 = vld [vmem:[#allocation7 + $0x8] sm:$0xff]
    %v66 = vmul.f32 %v64, %v61
    %v67 = vmul.f32 %v65, %v63
    %v68 = vld [vmem:[#allocation2] sm:$0xff]
    %v69 = vld [vmem:[#allocation2 + $0x8] sm:$0xff]
    %v70 = vadd.f32 %v66, %v68
    %v71 = vadd.f32 %v67, %v69
    %72 = vst [vmem:[#allocation8] sm:$0xff] %v70
    %73 = vst [vmem:[#allocation8 + $0x8] sm:$0xff] %v71
    // Predicated region
    $region26: #{tpu_custom_call.1} parent=1 // pred_check
      _
    $region27: #{tpu_custom_call.1} parent=1 // pred_check_branch
      %75 = sbr.rel (0) target = $region29
    $region28: #{tpu_custom_call.1} parent=1 // pred_region
      %s77 = ssub.s32 256, 256
      %78 = vsyncadd [#allocation4], %s77
      %s79 = sshll.u32 [#allocation8], 4
      %s80 = int_to_ptr.vmem [resolvable:$true] %s79
      %85 = dma.vmem_to_hbm [thread:$0]  %s80, 256, %s3, [#allocation4], 128, 128, 8
    $region29: #{tpu_custom_call.1} parent=1 // pred_fallthru
      _
    // Predicated region
    $region30: #{tpu_custom_call.1} parent=1 // pred_check
      _
    $region31: #{tpu_custom_call.1} parent=1 // pred_check_branch
      %87 = sbr.rel (0) target = $region33
    $region32: #{tpu_custom_call.1} parent=1 // pred_region
      %88 = dma.done [#allocation4], 256
    $region33: #{tpu_custom_call.1} parent=1 // pred_fallthru
      _
    %89 = vsyncpa [#allocation3], 1
    %90 = vsyncpa [#allocation6], 1
    %91 = vsyncpa [#allocation4], 1

</llo_original>
